<compile_context>
chip_gen: v7x
topology: tpu7x:2x2x1
jax: 0.10.0
libtpu: 0.0.40
codegen_flags: <defaults>
</compile_context>

<pallas_src>
import functools

import jax
import jax.numpy as jnp
from jax.experimental import pallas as pl
from jax.experimental.pallas import tpu as pltpu


def critic_kernel(state_ref, action_ref,
                  w1s_ref, w1a_ref, b1_ref,
                  w2_ref, b2_ref,
                  w3_ref, b3_ref,
                  out_ref):
    # Layer 1: split matmul replaces the concat along the feature axis.
    h = jnp.dot(state_ref[...], w1s_ref[...], preferred_element_type=jnp.float32)
    h = h + jnp.dot(action_ref[...], w1a_ref[...],
                    preferred_element_type=jnp.float32)
    h = jnp.maximum(h + b1_ref[...], 0.0)

    # Layer 2: Linear + ReLU on the MXU.
    h = jnp.dot(h, w2_ref[...], preferred_element_type=jnp.float32) + b2_ref[...]
    h = jnp.maximum(h, 0.0)

    # Output layer (out_features == 1): VPU multiply + lane reduce instead of
    # a 1-column MXU matmul.  w3_ref is a (1, H) row, broadcast over rows.
    q = jnp.sum(h * w3_ref[...], axis=-1, keepdims=True) + b3_ref[...]
    out_ref[...] = q.astype(out_ref.dtype)


def _round_up(x, m):
    return ((x + m - 1) // m) * m


@functools.partial(jax.jit, static_argnames=("tile_b",))
def critic_forward(state, action, params, *, tile_b=256):
    """Q(state, action) for a batch.  params = [(W1,b1),(W2,b2),(W3,b3)] with
    W stored as (in_features, out_features) and b as (1, out_features)."""
    (w1, b1), (w2, b2), (w3, b3) = params
    batch, state_size = state.shape
    action_size = action.shape[1]
    hidden1 = w1.shape[1]
    hidden2 = w2.shape[1]

    # Split W1 so the kernel never has to concatenate along the lane axis.
    w1s = w1[:state_size]           # (state_size, H1)
    w1a = w1[state_size:]           # (action_size, H1)
    w3_row = jnp.reshape(w3, (1, hidden2))  # (1, H2) row for the VPU reduction

    # Batch tiling: tile must be a multiple of 8 (sublane); pad batch to a
    # whole number of tiles so every BlockSpec is exact.
    tb = min(tile_b, _round_up(batch, 8))
    padded = _round_up(batch, tb)
    if padded != batch:
        pad = padded - batch
        state = jnp.pad(state, ((0, pad), (0, 0)))
        action = jnp.pad(action, ((0, pad), (0, 0)))
    grid = (padded // tb,)

    def _batch_spec(feat):
        return pl.BlockSpec((tb, feat), lambda i: (i, 0))

    def _resident_spec(shape):
        return pl.BlockSpec(shape, lambda i: (0, 0))

    out = pl.pallas_call(
        critic_kernel,
        out_shape=jax.ShapeDtypeStruct((padded, 1), jnp.float32),
        grid=grid,
        in_specs=[
            _batch_spec(state_size),              # state
            _batch_spec(action_size),             # action
            _resident_spec((state_size, hidden1)),   # W1_state
            _resident_spec((action_size, hidden1)),  # W1_action
            _resident_spec((1, hidden1)),            # b1
            _resident_spec((hidden1, hidden2)),      # W2
            _resident_spec((1, hidden2)),            # b2
            _resident_spec((1, hidden2)),            # W3 row
            _resident_spec((1, 1)),                  # b3
        ],
        out_specs=pl.BlockSpec((tb, 1), lambda i: (i, 0)),
        compiler_params=pltpu.CompilerParams(
            dimension_semantics=("parallel",)),
    )(state, action, w1s, w1a, b1, w2, b2, w3_row, b3)

    return out[:batch]


def init_critic_params(key, state_size, action_size, hidden_sizes=(128, 128)):
    """PyTorch-Linear-style init: U(-1/sqrt(fan_in), 1/sqrt(fan_in)).

    Weights stored transposed: (in_features, out_features).
    Biases stored as (1, out_features).
    """
    sizes = [state_size + action_size, *hidden_sizes, 1]
    params = []
    for fan_in, fan_out in zip(sizes[:-1], sizes[1:]):
        key, kw, kb = jax.random.split(key, 3)
        bound = 1.0 / (fan_in ** 0.5)
        w = jax.random.uniform(kw, (fan_in, fan_out), jnp.float32, -bound, bound)
        b = jax.random.uniform(kb, (1, fan_out), jnp.float32, -bound, bound)
        params.append((w, b))
    return params


def critic_reference(state, action, params):
    x = jnp.concatenate([state, action], axis=1)
    for w, b in params[:-1]:
        x = jnp.maximum(x @ w + b, 0.0)
    w, b = params[-1]
    return x @ w + b


if __name__ == "__main__":
    key = jax.random.PRNGKey(0)
    state_size, action_size = 24, 8
    hidden_sizes = (128, 128)   # matches the PyTorch module's default

    k_state, k_action, k_params, k_state2, k_action2 = jax.random.split(key, 5)
    params = init_critic_params(k_params, state_size, action_size, hidden_sizes)

    # Small smoke test (batch=2 -> padded to one 8-row tile).
    batch = 2
    state = jax.random.normal(k_state, (batch, state_size), jnp.float32)
    action = jax.random.normal(k_action, (batch, action_size), jnp.float32)
    out = jax.block_until_ready(critic_forward(state, action, params))
    ref = critic_reference(state, action, params)
    assert out.shape == (batch, 1), out.shape
    assert jnp.allclose(out, ref, atol=1e-5, rtol=1e-5), (out, ref)

    # Larger batch to exercise the batch grid (grid > 1) + padding path.
    batch2 = 300
    state2 = jax.random.normal(k_state2, (batch2, state_size), jnp.float32)
    action2 = jax.random.normal(k_action2, (batch2, action_size), jnp.float32)
    out2 = jax.block_until_ready(critic_forward(state2, action2, params))
    ref2 = critic_reference(state2, action2, params)
    assert out2.shape == (batch2, 1), out2.shape
    assert jnp.allclose(out2, ref2, atol=1e-5, rtol=1e-5)

    print("KERNEL_OK")
</pallas_src>

<mosaic_0001>
module attributes {stable_mosaic.version = 11 : i64} {
  func.func @critic_kernel(%arg0: i32, %arg1: memref<8x24xf32, #tpu.memory_space<vmem>>, %arg2: memref<8x8xf32, #tpu.memory_space<vmem>>, %arg3: memref<24x128xf32, #tpu.memory_space<vmem>>, %arg4: memref<8x128xf32, #tpu.memory_space<vmem>>, %arg5: memref<1x128xf32, #tpu.memory_space<vmem>>, %arg6: memref<128x128xf32, #tpu.memory_space<vmem>>, %arg7: memref<1x128xf32, #tpu.memory_space<vmem>>, %arg8: memref<1x128xf32, #tpu.memory_space<vmem>>, %arg9: memref<1x1xf32, #tpu.memory_space<vmem>>, %arg10: memref<8x1xf32, #tpu.memory_space<vmem>>) attributes {dimension_semantics = [#tpu.dimension_semantics<parallel>], iteration_bounds = array<i64: 1>, scalar_prefetch = 0 : i64, scratch_operands = 0 : i64, tpu.core_type = #tpu.core_type<tc>, window_params = [{transform_indices = @transform_0, window_bounds = array<i64: 8, 24>}, {transform_indices = @transform_1, window_bounds = array<i64: 8, 8>}, {pipeline_mode = #tpu.pipeline_mode<synchronous>, transform_indices = @transform_2, window_bounds = array<i64: 24, 128>}, {pipeline_mode = #tpu.pipeline_mode<synchronous>, transform_indices = @transform_3, window_bounds = array<i64: 8, 128>}, {pipeline_mode = #tpu.pipeline_mode<synchronous>, transform_indices = @transform_4, window_bounds = array<i64: 1, 128>}, {pipeline_mode = #tpu.pipeline_mode<synchronous>, transform_indices = @transform_5, window_bounds = array<i64: 128, 128>}, {pipeline_mode = #tpu.pipeline_mode<synchronous>, transform_indices = @transform_6, window_bounds = array<i64: 1, 128>}, {pipeline_mode = #tpu.pipeline_mode<synchronous>, transform_indices = @transform_7, window_bounds = array<i64: 1, 128>}, {pipeline_mode = #tpu.pipeline_mode<synchronous>, transform_indices = @transform_8, window_bounds = array<i64: 1, 1>}, {transform_indices = @transform_9, window_bounds = array<i64: 8, 1>}]} {
    %c0 = arith.constant 0 : index
    %c0_0 = arith.constant 0 : index
    %0 = vector.load %arg1[%c0, %c0_0] : memref<8x24xf32, #tpu.memory_space<vmem>>, vector<8x24xf32>
    %c0_1 = arith.constant 0 : index
    %c0_2 = arith.constant 0 : index
    %1 = vector.load %arg3[%c0_1, %c0_2] : memref<24x128xf32, #tpu.memory_space<vmem>>, vector<24x128xf32>
    %cst = arith.constant dense<0.000000e+00> : vector<8x128xf32>
    %2 = tpu.matmul %0, %1, %cst {dimension_numbers = #tpu.dot_dimension_numbers<[1], [0], [0], [1], [0, 0, 1, 1], [], []>} : vector<8x24xf32>, vector<24x128xf32>, vector<8x128xf32> -> vector<8x128xf32>
    %c0_3 = arith.constant 0 : index
    %c0_4 = arith.constant 0 : index
    %3 = vector.load %arg2[%c0_3, %c0_4] : memref<8x8xf32, #tpu.memory_space<vmem>>, vector<8x8xf32>
    %c0_5 = arith.constant 0 : index
    %c0_6 = arith.constant 0 : index
    %4 = vector.load %arg4[%c0_5, %c0_6] : memref<8x128xf32, #tpu.memory_space<vmem>>, vector<8x128xf32>
    %cst_7 = arith.constant dense<0.000000e+00> : vector<8x128xf32>
    %5 = tpu.matmul %3, %4, %cst_7 {dimension_numbers = #tpu.dot_dimension_numbers<[1], [0], [0], [1], [0, 0, 1, 1], [], []>} : vector<8x8xf32>, vector<8x128xf32>, vector<8x128xf32> -> vector<8x128xf32>
    %6 = arith.addf %2, %5 : vector<8x128xf32>
    %c0_8 = arith.constant 0 : index
    %c0_9 = arith.constant 0 : index
    %7 = vector.load %arg5[%c0_8, %c0_9] : memref<1x128xf32, #tpu.memory_space<vmem>>, vector<1x128xf32>
    %8 = vector.broadcast %7 : vector<1x128xf32> to vector<8x128xf32>
    %9 = arith.addf %6, %8 : vector<8x128xf32>
    %cst_10 = arith.constant 0.000000e+00 : f32
    %10 = vector.broadcast %cst_10 : f32 to vector<8x128xf32>
    %11 = arith.maximumf %9, %10 : vector<8x128xf32>
    %c0_11 = arith.constant 0 : index
    %c0_12 = arith.constant 0 : index
    %12 = vector.load %arg6[%c0_11, %c0_12] : memref<128x128xf32, #tpu.memory_space<vmem>>, vector<128x128xf32>
    %cst_13 = arith.constant dense<0.000000e+00> : vector<8x128xf32>
    %13 = tpu.matmul %11, %12, %cst_13 {dimension_numbers = #tpu.dot_dimension_numbers<[1], [0], [0], [1], [0, 0, 1, 1], [], []>} : vector<8x128xf32>, vector<128x128xf32>, vector<8x128xf32> -> vector<8x128xf32>
    %c0_14 = arith.constant 0 : index
    %c0_15 = arith.constant 0 : index
    %14 = vector.load %arg7[%c0_14, %c0_15] : memref<1x128xf32, #tpu.memory_space<vmem>>, vector<1x128xf32>
    %15 = vector.broadcast %14 : vector<1x128xf32> to vector<8x128xf32>
    %16 = arith.addf %13, %15 : vector<8x128xf32>
    %cst_16 = arith.constant 0.000000e+00 : f32
    %17 = vector.broadcast %cst_16 : f32 to vector<8x128xf32>
    %18 = arith.maximumf %16, %17 : vector<8x128xf32>
    %c0_17 = arith.constant 0 : index
    %c0_18 = arith.constant 0 : index
    %19 = vector.load %arg8[%c0_17, %c0_18] : memref<1x128xf32, #tpu.memory_space<vmem>>, vector<1x128xf32>
    %20 = vector.broadcast %19 : vector<1x128xf32> to vector<8x128xf32>
    %21 = arith.mulf %18, %20 : vector<8x128xf32>
    %cst_19 = arith.constant dense<0.000000e+00> : vector<8xf32>
    %22 = vector.multi_reduction <add>, %21, %cst_19 [1] : vector<8x128xf32> to vector<8xf32>
    %23 = vector.shape_cast %22 : vector<8xf32> to vector<8x1xf32>
    %c0_20 = arith.constant 0 : index
    %c0_21 = arith.constant 0 : index
    %24 = vector.load %arg9[%c0_20, %c0_21] : memref<1x1xf32, #tpu.memory_space<vmem>>, vector<1x1xf32>
    %25 = vector.broadcast %24 : vector<1x1xf32> to vector<8x1xf32>
    %26 = arith.addf %23, %25 : vector<8x1xf32>
    %c0_22 = arith.constant 0 : index
    %c0_23 = arith.constant 0 : index
    %27 = vector.load %arg10[%c0_22, %c0_23] : memref<8x1xf32, #tpu.memory_space<vmem>>, vector<8x1xf32>
    tpu.vector_store %arg10[%c0_22, %c0_23], %26 {strides = array<i32>} : memref<8x1xf32, #tpu.memory_space<vmem>>, vector<8x1xf32>,
    return
  }
  func.func @transform_0(%arg0: i32) -> (i32, i32) {
    %c0_i32 = arith.constant 0 : i32
    %c0_i32_0 = arith.constant 0 : i32
    return %arg0, %c0_i32 : i32, i32
  }
  func.func @transform_1(%arg0: i32) -> (i32, i32) {
    %c0_i32 = arith.constant 0 : i32
    %c0_i32_0 = arith.constant 0 : i32
    return %arg0, %c0_i32 : i32, i32
  }
  func.func @transform_2(%arg0: i32) -> (i32, i32) {
    %c0_i32 = arith.constant 0 : i32
    %c0_i32_0 = arith.constant 0 : i32
    %c0_i32_1 = arith.constant 0 : i32
    return %c0_i32, %c0_i32_0 : i32, i32
  }
  func.func @transform_3(%arg0: i32) -> (i32, i32) {
    %c0_i32 = arith.constant 0 : i32
    %c0_i32_0 = arith.constant 0 : i32
    %c0_i32_1 = arith.constant 0 : i32
    return %c0_i32, %c0_i32_0 : i32, i32
  }
  func.func @transform_4(%arg0: i32) -> (i32, i32) {
    %c0_i32 = arith.constant 0 : i32
    %c0_i32_0 = arith.constant 0 : i32
    %c0_i32_1 = arith.constant 0 : i32
    return %c0_i32, %c0_i32_0 : i32, i32
  }
  func.func @transform_5(%arg0: i32) -> (i32, i32) {
    %c0_i32 = arith.constant 0 : i32
    %c0_i32_0 = arith.constant 0 : i32
    %c0_i32_1 = arith.constant 0 : i32
    return %c0_i32, %c0_i32_0 : i32, i32
  }
  func.func @transform_6(%arg0: i32) -> (i32, i32) {
    %c0_i32 = arith.constant 0 : i32
    %c0_i32_0 = arith.constant 0 : i32
    %c0_i32_1 = arith.constant 0 : i32
    return %c0_i32, %c0_i32_0 : i32, i32
  }
  func.func @transform_7(%arg0: i32) -> (i32, i32) {
    %c0_i32 = arith.constant 0 : i32
    %c0_i32_0 = arith.constant 0 : i32
    %c0_i32_1 = arith.constant 0 : i32
    return %c0_i32, %c0_i32_0 : i32, i32
  }
  func.func @transform_8(%arg0: i32) -> (i32, i32) {
    %c0_i32 = arith.constant 0 : i32
    %c0_i32_0 = arith.constant 0 : i32
    %c0_i32_1 = arith.constant 0 : i32
    return %c0_i32, %c0_i32_0 : i32, i32
  }
  func.func @transform_9(%arg0: i32) -> (i32, i32) {
    %c0_i32 = arith.constant 0 : i32
    %c0_i32_0 = arith.constant 0 : i32
    return %arg0, %c0_i32 : i32, i32
  }
}

</mosaic_0001>

<llo_original>
// kernel: critic_forward.1
$region0: #{critic_forward.1}
  #allocation0 [shape = 'u32[]', space=smem, size = 0x4, offset = 0x4, fixed_abs, tag = 'smem constant byte address 0x4 - core index']
  #allocation1 [shape = 'u32[144,128]{1,0:T(1,128)}', space=vmem, size = 0x12000, scoped, tag = 'internal scratch']
  #allocation2 [shape = 'f32[1,1]{1,0:T(1,128)S(1)}', space=vmem, size = 0x200, scoped, tag = 'scoped memory for critic_forward.1']
  %s0 = inlined_call_operand.vmem [shape: f32[8,24], index: 0, kind: input, shape index: {}]
  %s1 = inlined_call_operand.vmem [shape: f32[8,8], index: 1, kind: input, shape index: {}]
  %s2 = inlined_call_operand.vmem [shape: f32[24,128], index: 2, kind: input, shape index: {}]
  %s3 = inlined_call_operand.vmem [shape: f32[8,128], index: 3, kind: input, shape index: {}]
  %s4 = inlined_call_operand.vmem [shape: f32[1,128], index: 4, kind: input, shape index: {}]
  %s5 = inlined_call_operand.hbm [shape: f32[128,128], index: 5, kind: input, shape index: {}]
  %s6 = inlined_call_operand.vmem [shape: f32[1,128], index: 6, kind: input, shape index: {}]
  %s7 = inlined_call_operand.vmem [shape: f32[1,128], index: 7, kind: input, shape index: {}]
  %s8 = inlined_call_operand.<no memory space> [shape: f32[1,1], index: 8, kind: input, shape index: {}]
  %s9 = inlined_call_operand.vmem [shape: f32[8,1], index: 9, kind: output, shape index: {}]
  %s10 = sld [smem:[#allocation0]]
  $region50: #{critic_forward.1} parent=0
    _
  %s12 = ssub.s32 1, %s10
  %s13 = scalar_select 0, %s12, %s10
  %v14 = vstv %s8
  %15 = vst [vmem:[#allocation2] sm:$0x1] %v14
  $region1: #{critic_forward.1} parent=0
    #allocation3 [shape = 'u8[65536]{0}', space=vmem, size = 0x10000, scoped, tag = 'input window, operand 5, single buffered']
    #allocation4 [shape = 's32[1]{0}', space=sflag, size = 0x4, scoped, tag = 'scoped memory for critic_forward.1']
    %16 = vsyncpa [#allocation4], 0
    // Predicated region
    $region2: #{critic_forward.1} parent=1 // pred_check
      _
    $region3: #{critic_forward.1} parent=1 // pred_check_branch
      %18 = sbr.rel (0) target = $region5
    $region4: #{critic_forward.1} parent=1 // pred_region
      _
    $region5: #{critic_forward.1} parent=1 // pred_fallthru
      _
    // Predicated region
    $region6: #{critic_forward.1} parent=1 // pred_check
      _
    $region7: #{critic_forward.1} parent=1 // pred_check_branch
      %20 = sbr.rel (0) target = $region9
    $region8: #{critic_forward.1} parent=1 // pred_region
      _
    $region9: #{critic_forward.1} parent=1 // pred_fallthru
      _
    // Predicated region
    $region10: #{critic_forward.1} parent=1 // pred_check
      _
    $region11: #{critic_forward.1} parent=1 // pred_check_branch
      %22 = sbr.rel (0) target = $region13
    $region12: #{critic_forward.1} parent=1 // pred_region
      _
    $region13: #{critic_forward.1} parent=1 // pred_fallthru
      _
    // Predicated region
    $region14: #{critic_forward.1} parent=1 // pred_check
      _
    $region15: #{critic_forward.1} parent=1 // pred_check_branch
      %24 = sbr.rel (0) target = $region17
    $region16: #{critic_forward.1} parent=1 // pred_region
      _
    $region17: #{critic_forward.1} parent=1 // pred_fallthru
      _
    // Predicated region
    $region18: #{critic_forward.1} parent=1 // pred_check
      _
    $region19: #{critic_forward.1} parent=1 // pred_check_branch
      %26 = sbr.rel (0) target = $region21
    $region20: #{critic_forward.1} parent=1 // pred_region
      _
    $region21: #{critic_forward.1} parent=1 // pred_fallthru
      _
    // Predicated region
    $region22: #{critic_forward.1} parent=1 // pred_check
      _
    $region23: #{critic_forward.1} parent=1 // pred_check_branch
      %28 = sbr.rel (0) target = $region25
    $region24: #{critic_forward.1} parent=1 // pred_region
      %s30 = ssub.s32 2048, 2048
      %31 = vsyncadd [#allocation4], %s30
      %s32 = sshll.u32 [#allocation3], 4
      %s33 = int_to_ptr.vmem [resolvable:$true] %s32
      %38 = dma.hbm_to_vmem [thread:$0]  %s5, 2048, %s33, [#allocation4], 128, 128, 8
    $region25: #{critic_forward.1} parent=1 // pred_fallthru
      _
    // Predicated region
    $region26: #{critic_forward.1} parent=1 // pred_check
      _
    $region27: #{critic_forward.1} parent=1 // pred_check_branch
      %40 = sbr.rel (0) target = $region29
    $region28: #{critic_forward.1} parent=1 // pred_region
      _
    $region29: #{critic_forward.1} parent=1 // pred_fallthru
      _
    // Predicated region
    $region30: #{critic_forward.1} parent=1 // pred_check
      _
    $region31: #{critic_forward.1} parent=1 // pred_check_branch
      %42 = sbr.rel (0) target = $region33
    $region32: #{critic_forward.1} parent=1 // pred_region
      _
    $region33: #{critic_forward.1} parent=1 // pred_fallthru
      _
    // Predicated region
    $region34: #{critic_forward.1} parent=1 // pred_check
      _
    $region35: #{critic_forward.1} parent=1 // pred_check_branch
      %44 = sbr.rel (0) target = $region37
    $region36: #{critic_forward.1} parent=1 // pred_region
      _
    $region37: #{critic_forward.1} parent=1 // pred_fallthru
      _
    // Predicated region
    $region38: #{critic_forward.1} parent=1 // pred_check
      _
    $region39: #{critic_forward.1} parent=1 // pred_check_branch
      %46 = sbr.rel (0) target = $region41
    $region40: #{critic_forward.1} parent=1 // pred_region
      %47 = dma.done [#allocation4], 2048
    $region41: #{critic_forward.1} parent=1 // pred_fallthru
      _
    %v48 = vld [vmem:[%s0] sm:$0xff]
    %v49 = vld [vmem:[%s2] sm:$0xff]
    %v50 = vld [vmem:[%s2 + $0x8] sm:$0xff]
    %v51 = vld [vmem:[%s2 + $0x10] sm:$0xff]
    %v52 = vld [vmem:[%s1] sm:$0xff]
    %v53 = vld [vmem:[%s3] sm:$0xff]
    %vm54 = vcmask 64512
    %v56 = vsel %vm54, %v52, 0
    %58 = vmatprep.subr.mxu0 0.0
    %59 = vmatpush1.msra.mxu0 %v53
    %60 = vmatprep.subr.mxu0 0.0
    %61 = vmatpush1.msra.mxu0 0.0
    %62 = vmatprep.subr.mxu0 0.0
    %63 = vmatpush1.msra.mxu0 0.0
    %64 = vmatprep.subr.mxu0 0.0
    %65 = vmatpush1.msra.mxu0 0.0
    %66 = vmatprep.subr.mxu0 0.0
    %67 = vmatpush1.msra.mxu0 0.0
    %68 = vmatprep.subr.mxu0 0.0
    %69 = vmatpush1.msra.mxu0 0.0
    %70 = vmatprep.subr.mxu0 0.0
    %71 = vmatpush1.msra.mxu0 0.0
    %72 = vmatprep.subr.mxu0 0.0
    %73 = vmatpush1.msra.mxu0 0.0
    %74 = vmatprep.subr.mxu0 0.0
    %75 = vmatpush1.msra.mxu0 0.0
    %76 = vmatprep.subr.mxu0 0.0
    %77 = vmatpush1.msra.mxu0 0.0
    %78 = vmatprep.subr.mxu0 0.0
    %79 = vmatpush1.msra.mxu0 0.0
    %80 = vmatprep.subr.mxu0 0.0
    %81 = vmatpush1.msra.mxu0 0.0
    %82 = vmatprep.subr.mxu0 0.0
    %83 = vmatpush1.msra.mxu0 0.0
    %84 = vmatprep.subr.mxu0 0.0
    %85 = vmatpush1.msra.mxu0 0.0
    %86 = vmatprep.subr.mxu0 0.0
    %87 = vmatpush1.msra.mxu0 0.0
    %88 = vmatprep.subr.mxu0 0.0
    %89 = vmatpush1.msra.mxu0 0.0
    %90 = vmatprep.subr.mxu0 0.0
    %91 = vmatpush1.msra.mxu0 0.0
    %92 = vmatprep.subr.mxu0 0.0
    %93 = vmatpush1.msra.mxu0 0.0
    %94 = vmatprep.subr.mxu0 0.0
    %95 = vmatpush1.msra.mxu0 0.0
    %96 = vmatprep.subr.mxu0 0.0
    %97 = vmatpush1.msra.mxu0 0.0
    %98 = vmatprep.subr.mxu0 0.0
    %99 = vmatpush1.msra.mxu0 0.0
    %100 = vmatprep.subr.mxu0 0.0
    %101 = vmatpush1.msra.mxu0 0.0
    %102 = vmatprep.subr.mxu0 0.0
    %103 = vmatpush1.msra.mxu0 0.0
    %104 = vmatprep.subr.mxu0 0.0
    %105 = vmatpush1.msra.mxu0 0.0
    %106 = vmatprep.subr.mxu0 0.0
    %107 = vmatpush1.msra.mxu0 0.0
    %108 = vmatprep.subr.mxu0 0.0
    %109 = vmatpush1.msra.mxu0 0.0
    %110 = vmatprep.subr.mxu0 0.0
    %111 = vmatpush1.msra.mxu0 0.0
    %112 = vmatprep.subr.mxu0 0.0
    %113 = vmatpush1.msra.mxu0 0.0
    %114 = vmatprep.subr.mxu0 0.0
    %115 = vmatpush1.msra.mxu0 0.0
    %116 = vmatprep.subr.mxu0 0.0
    %117 = vmatpush1.msra.mxu0 0.0
    %118 = vmatprep.subr.mxu0 0.0
    %119 = vmatpush1.msra.mxu0 0.0
    %120 = vmatprep.subr.mxu0 0.0
    %121 = vmatpush1.msra.mxu0 0.0
    %122 = vmatprep.mubr.f32.mxu0 0.0
    %123 = vmatmul.mubr.f32.gmra.mrb[0].mxu0 %v56
    %v124 = vpop.f32.mrb[0].mxu0
    %v125 = vadd.f32 0.0, %v124
    %v126 = vpop.f32.mrb[0].mxu0
    %127 = vdwg.mxu0
    %vm128 = vcmask 195584
    %v130 = vsel %vm128, %v48, 0
    %132 = vmatprep.subr.mxu0 0.0
    %133 = vmatpush1.msra.mxu0 %v49
    %134 = vmatprep.subr.mxu0 0.0
    %135 = vmatpush1.msra.mxu0 %v50
    %136 = vmatprep.subr.mxu0 0.0
    %137 = vmatpush1.msra.mxu0 %v51
    %138 = vmatprep.subr.mxu0 0.0
    %139 = vmatpush1.msra.mxu0 0.0
    %140 = vmatprep.subr.mxu0 0.0
    %141 = vmatpush1.msra.mxu0 0.0
    %142 = vmatprep.subr.mxu0 0.0
    %143 = vmatpush1.msra.mxu0 0.0
    %144 = vmatprep.subr.mxu0 0.0
    %145 = vmatpush1.msra.mxu0 0.0
    %146 = vmatprep.subr.mxu0 0.0
    %147 = vmatpush1.msra.mxu0 0.0
    %148 = vmatprep.subr.mxu0 0.0
    %149 = vmatpush1.msra.mxu0 0.0
    %150 = vmatprep.subr.mxu0 0.0
    %151 = vmatpush1.msra.mxu0 0.0
    %152 = vmatprep.subr.mxu0 0.0
    %153 = vmatpush1.msra.mxu0 0.0
    %154 = vmatprep.subr.mxu0 0.0
    %155 = vmatpush1.msra.mxu0 0.0
    %156 = vmatprep.subr.mxu0 0.0
    %157 = vmatpush1.msra.mxu0 0.0
    %158 = vmatprep.subr.mxu0 0.0
    %159 = vmatpush1.msra.mxu0 0.0
    %160 = vmatprep.subr.mxu0 0.0
    %161 = vmatpush1.msra.mxu0 0.0
    %162 = vmatprep.subr.mxu0 0.0
    %163 = vmatpush1.msra.mxu0 0.0
    %164 = vmatprep.subr.mxu0 0.0
    %165 = vmatpush1.msra.mxu0 0.0
    %166 = vmatprep.subr.mxu0 0.0
    %167 = vmatpush1.msra.mxu0 0.0
    %168 = vmatprep.subr.mxu0 0.0
    %169 = vmatpush1.msra.mxu0 0.0
    %170 = vmatprep.subr.mxu0 0.0
    %171 = vmatpush1.msra.mxu0 0.0
    %172 = vmatprep.subr.mxu0 0.0
    %173 = vmatpush1.msra.mxu0 0.0
    %174 = vmatprep.subr.mxu0 0.0
    %175 = vmatpush1.msra.mxu0 0.0
    %176 = vmatprep.subr.mxu0 0.0
    %177 = vmatpush1.msra.mxu0 0.0
    %178 = vmatprep.subr.mxu0 0.0
    %179 = vmatpush1.msra.mxu0 0.0
    %180 = vmatprep.subr.mxu0 0.0
    %181 = vmatpush1.msra.mxu0 0.0
    %182 = vmatprep.subr.mxu0 0.0
    %183 = vmatpush1.msra.mxu0 0.0
    %184 = vmatprep.subr.mxu0 0.0
    %185 = vmatpush1.msra.mxu0 0.0
    %186 = vmatprep.subr.mxu0 0.0
    %187 = vmatpush1.msra.mxu0 0.0
    %188 = vmatprep.subr.mxu0 0.0
    %189 = vmatpush1.msra.mxu0 0.0
    %190 = vmatprep.subr.mxu0 0.0
    %191 = vmatpush1.msra.mxu0 0.0
    %192 = vmatprep.subr.mxu0 0.0
    %193 = vmatpush1.msra.mxu0 0.0
    %194 = vmatprep.subr.mxu0 0.0
    %195 = vmatpush1.msra.mxu0 0.0
    %196 = vmatprep.mubr.f32.mxu0 0.0
    %197 = vmatmul.mubr.f32.gmra.mrb[0].mxu0 %v130
    %v198 = vpop.f32.mrb[0].mxu0
    %v199 = vadd.f32 %v125, %v198
    %v200 = vpop.f32.mrb[0].mxu0
    %201 = vdwg.mxu0
    %v202 = vld [vmem:[%s4] sm:$0x1]
    %v204 = vlaneseq
    %v205 = vshrl.u32 %v204, 7
    %v206 = vsub.s32 0, %v205
    %v207 = vrot.slane %v202, %v206
    %v209 = vadd.f32 %v199, %v207
    %v210 = vmax.f32 %v209, 0.0
    %v211 = vld [vmem:[#allocation3] sm:$0xff]
    %v212 = vld [vmem:[#allocation3 + $0x8] sm:$0xff]
    %v213 = vld [vmem:[#allocation3 + $0x10] sm:$0xff]
    %v214 = vld [vmem:[#allocation3 + $0x18] sm:$0xff]
    %v215 = vld [vmem:[#allocation3 + $0x20] sm:$0xff]
    %v216 = vld [vmem:[#allocation3 + $0x28] sm:$0xff]
    %v217 = vld [vmem:[#allocation3 + $0x30] sm:$0xff]
    %v218 = vld [vmem:[#allocation3 + $0x38] sm:$0xff]
    %v219 = vld [vmem:[#allocation3 + $0x40] sm:$0xff]
    %v220 = vld [vmem:[#allocation3 + $0x48] sm:$0xff]
    %v221 = vld [vmem:[#allocation3 + $0x50] sm:$0xff]
    %v222 = vld [vmem:[#allocation3 + $0x58] sm:$0xff]
    %v223 = vld [vmem:[#allocation3 + $0x60] sm:$0xff]
    %v224 = vld [vmem:[#allocation3 + $0x68] sm:$0xff]
    %v225 = vld [vmem:[#allocation3 + $0x70] sm:$0xff]
    %v226 = vld [vmem:[#allocation3 + $0x78] sm:$0xff]
    %v227 = vld [vmem:[%s6] sm:$0x1]
    %v229 = vlaneseq
    %v230 = vshrl.u32 %v229, 7
    %v231 = vsub.s32 0, %v230
    %v232 = vrot.slane %v227, %v231
    %234 = vmatprep.subr.mxu0 0.0
    %235 = vmatpush1.msra.mxu0 %v211
    %236 = vmatprep.subr.mxu0 0.0
    %237 = vmatpush1.msra.mxu0 %v212
    %238 = vmatprep.subr.mxu0 0.0
    %239 = vmatpush1.msra.mxu0 %v213
    %240 = vmatprep.subr.mxu0 0.0
    %241 = vmatpush1.msra.mxu0 %v214
    %242 = vmatprep.subr.mxu0 0.0
    %243 = vmatpush1.msra.mxu0 %v215
    %244 = vmatprep.subr.mxu0 0.0
    %245 = vmatpush1.msra.mxu0 %v216
    %246 = vmatprep.subr.mxu0 0.0
    %247 = vmatpush1.msra.mxu0 %v217
    %248 = vmatprep.subr.mxu0 0.0
    %249 = vmatpush1.msra.mxu0 %v218
    %250 = vmatprep.subr.mxu0 0.0
    %251 = vmatpush1.msra.mxu0 %v219
    %252 = vmatprep.subr.mxu0 0.0
    %253 = vmatpush1.msra.mxu0 %v220
    %254 = vmatprep.subr.mxu0 0.0
    %255 = vmatpush1.msra.mxu0 %v221
    %256 = vmatprep.subr.mxu0 0.0
    %257 = vmatpush1.msra.mxu0 %v222
    %258 = vmatprep.subr.mxu0 0.0
    %259 = vmatpush1.msra.mxu0 %v223
    %260 = vmatprep.subr.mxu0 0.0
    %261 = vmatpush1.msra.mxu0 %v224
    %262 = vmatprep.subr.mxu0 0.0
    %263 = vmatpush1.msra.mxu0 %v225
    %264 = vmatprep.subr.mxu0 0.0
    %265 = vmatpush1.msra.mxu0 %v226
    %266 = vmatprep.subr.mxu0 0.0
    %267 = vmatpush1.msra.mxu0 0.0
    %268 = vmatprep.subr.mxu0 0.0
    %269 = vmatpush1.msra.mxu0 0.0
    %270 = vmatprep.subr.mxu0 0.0
    %271 = vmatpush1.msra.mxu0 0.0
    %272 = vmatprep.subr.mxu0 0.0
    %273 = vmatpush1.msra.mxu0 0.0
    %274 = vmatprep.subr.mxu0 0.0
    %275 = vmatpush1.msra.mxu0 0.0
    %276 = vmatprep.subr.mxu0 0.0
    %277 = vmatpush1.msra.mxu0 0.0
    %278 = vmatprep.subr.mxu0 0.0
    %279 = vmatpush1.msra.mxu0 0.0
    %280 = vmatprep.subr.mxu0 0.0
    %281 = vmatpush1.msra.mxu0 0.0
    %282 = vmatprep.subr.mxu0 0.0
    %283 = vmatpush1.msra.mxu0 0.0
    %284 = vmatprep.subr.mxu0 0.0
    %285 = vmatpush1.msra.mxu0 0.0
    %286 = vmatprep.subr.mxu0 0.0
    %287 = vmatpush1.msra.mxu0 0.0
    %288 = vmatprep.subr.mxu0 0.0
    %289 = vmatpush1.msra.mxu0 0.0
    %290 = vmatprep.subr.mxu0 0.0
    %291 = vmatpush1.msra.mxu0 0.0
    %292 = vmatprep.subr.mxu0 0.0
    %293 = vmatpush1.msra.mxu0 0.0
    %294 = vmatprep.subr.mxu0 0.0
    %295 = vmatpush1.msra.mxu0 0.0
    %296 = vmatprep.subr.mxu0 0.0
    %297 = vmatpush1.msra.mxu0 0.0
    %298 = vmatprep.mubr.f32.mxu0 0.0
    %299 = vmatmul.mubr.f32.gmra.mrb[0].mxu0 %v210
    %v300 = vpop.f32.mrb[0].mxu0
    %v301 = vadd.f32 %v232, %v300
    %v302 = vpop.f32.mrb[0].mxu0
    %303 = vdwg.mxu0
    %v304 = vmax.f32 %v301, 0.0
    %v305 = vld [vmem:[%s7] sm:$0x1]
    %v307 = vlaneseq
    %v308 = vshrl.u32 %v307, 7
    %v309 = vsub.s32 0, %v308
    %v310 = vrot.slane %v305, %v309
    %v312 = vmul.f32 %v304, %v310
    %313 = vadd.xlane.f32.xlu0 %v312
    %v314 = vpop.xlane.xlu0 %313
    %v315 = vld [vmem:[#allocation2] sm:$0x1]
    %v317 = vlaneseq
    %v318 = vshrl.u32 %v317, 7
    %v319 = vsub.s32 0, %v318
    %v320 = vrot.slane %v315, %v319
    %v322 = vadd.f32 %v314, %v320
    %vm323 = vcmask 7168
    %324 = vst.msk [vmem:[%s9] sm:$0xff] %vm323, %v322
    // Predicated region
    $region42: #{critic_forward.1} parent=1 // pred_check
      _
    $region43: #{critic_forward.1} parent=1 // pred_check_branch
      %326 = sbr.rel (0) target = $region45
    $region44: #{critic_forward.1} parent=1 // pred_region
      _
    $region45: #{critic_forward.1} parent=1 // pred_fallthru
      _
    // Predicated region
    $region46: #{critic_forward.1} parent=1 // pred_check
      _
    $region47: #{critic_forward.1} parent=1 // pred_check_branch
      %328 = sbr.rel (0) target = $region49
    $region48: #{critic_forward.1} parent=1 // pred_region
      _
    $region49: #{critic_forward.1} parent=1 // pred_fallthru
      _
    %329 = vsyncpa [#allocation4], 1

</llo_original>
